<compile_context>
chip_gen: v7x
topology: tpu7x:2x2x1
jax: 0.10.0
libtpu: 0.0.40
codegen_flags: <defaults>
</compile_context>

<pallas_src>
import functools

import jax
import jax.numpy as jnp
from jax.experimental import pallas as pl
from jax.experimental.pallas import tpu as pltpu


def _round_up(a: int, b: int) -> int:
    return (a + b - 1) // b * b


def _pick_hidden_tile(H: int):
    """Pick (tk, tn) tiles of the hidden dim; multiples of 128 or == H."""
    if H <= 1024:
        return H, H                      # small weight: single hidden block
    for t in (512, 256, 128):
        if H % t == 0:
            return t, t
    return H, H                          # irregular H: resident weight block


def _mix32(x):
    """splitmix32-style 32-bit finalizer (uint32 wraparound arithmetic)."""
    x = (x ^ (x >> 16)) * jnp.uint32(0x7FEB352D)
    x = (x ^ (x >> 15)) * jnp.uint32(0x846CA68B)
    x = x ^ (x >> 16)
    return x


def _regulated_kernel(seed_ref, x_mm_ref, wt_ref, b_ref, x_ep_ref, o_ref,
                      acc_ref, *, p, training, tm, tn):
    """One (tm, tn) output tile of: out = x * dropout(sigmoid(x @ Wt + b))."""
    # All grid-position reads happen at the top level of the kernel so that
    # pl.when branch jaxprs contain no program_id/num_programs primitives.
    i = pl.program_id(0)
    j = pl.program_id(1)
    k = pl.program_id(2)
    nk = pl.num_programs(2)
    row0 = i * tm                         # global row offset of this tile
    col0 = j * tn                         # global col offset of this tile
    seed0 = seed_ref[0]                   # SMEM scalar

    @pl.when(k == 0)
    def _init():
        acc_ref[...] = jnp.zeros_like(acc_ref)

    # Native-dtype MXU matmul with f32 accumulation (no operand up-casts).
    acc_ref[...] += jnp.dot(x_mm_ref[...], wt_ref[...],
                            preferred_element_type=jnp.float32)

    @pl.when(k == nk - 1)
    def _finalize():
        z = acc_ref[...] + b_ref[...].astype(jnp.float32)          # (tm, tn)
        gate = jax.nn.sigmoid(z)                                    # f32 epilogue

        if training and p > 0.0:
            if p >= 1.0:
                gate = jnp.zeros_like(gate)
            else:
                # Inverted dropout via counter-based hash: key = f(seed, r, c).
                rows = (jax.lax.broadcasted_iota(jnp.int32, (tm, tn), 0)
                        + row0).astype(jnp.uint32)
                cols = (jax.lax.broadcasted_iota(jnp.int32, (tm, tn), 1)
                        + col0).astype(jnp.uint32)
                seed_u = seed0.astype(jnp.uint32)
                key = ((rows * jnp.uint32(0x9E3779B1))
                       ^ (cols * jnp.uint32(0x85EBCA77))
                       ^ (seed_u * jnp.uint32(0xC2B2AE3D)
                          + jnp.uint32(0x27D4EB2F)))
                bits = _mix32(key)
                # Drop the sign bit and compare as int32 (safe signed compare).
                bits31 = (bits & jnp.uint32(0x7FFFFFFF)).astype(jnp.int32)
                threshold = jnp.int32(min(int(p * 2.0 ** 31), 2 ** 31 - 1))
                keep = bits31 >= threshold                          # P(keep)=1-p
                gate = jnp.where(keep, gate * (1.0 / (1.0 - p)),
                                 jnp.zeros_like(gate))

        o_ref[...] = (x_ep_ref[...].astype(jnp.float32) * gate).astype(o_ref.dtype)


def regulated_layer(x, weight, bias=None, *, p=0.0, training=False, seed=0,
                    tile_m=256):
    """x: (..., H). weight: (H, H) PyTorch-style (out_features, in_features).
    bias: (H,) or None. Returns x * dropout(sigmoid(x @ weight.T + bias))."""
    H = x.shape[-1]
    orig_shape = x.shape
    x2d = x.reshape(-1, H)
    M = x2d.shape[0]

    # Sublane packing: 8 rows/vreg for 4-byte dtypes, 16 for 2-byte (bf16).
    sub = 8 if x.dtype.itemsize >= 4 else 16
    tm = max(sub, min(int(tile_m), _round_up(M, sub)))
    tm = _round_up(tm, sub)
    Mp = _round_up(M, tm)
    if Mp != M:
        x2d = jnp.pad(x2d, ((0, Mp - M), (0, 0)))

    tk, tn = _pick_hidden_tile(H)
    gm, gn, gk = Mp // tm, H // tn, H // tk

    wt = weight.T                                                  # (H_in, H_out)
    b_row = (bias if bias is not None
             else jnp.zeros((H,), x.dtype)).reshape(1, H)
    seed_arr = jnp.asarray([seed], dtype=jnp.int32)

    kernel = functools.partial(_regulated_kernel, p=float(p),
                               training=bool(training), tm=tm, tn=tn)

    # Explicit VMEM budget (double-buffered in/out blocks + f32 accumulator),
    # clamped so it stays valid on v7x (64 MiB physical VMEM per core).
    in_bs = x2d.dtype.itemsize
    w_bs = wt.dtype.itemsize
    vmem_est = (2 * tm * tk * in_bs            # x matmul tiles
                + 2 * tk * tn * w_bs           # weight tiles
                + 2 * tm * tn * in_bs          # x epilogue tiles
                + 2 * tm * tn * x.dtype.itemsize   # output tiles
                + tm * tn * 4                  # f32 accumulator scratch
                + 2 * tn * in_bs)              # bias row
    vmem_limit = int(min(max(2 * vmem_est, 32 << 20), 60 << 20))

    cost = pl.CostEstimate(
        flops=2 * Mp * H * H,
        transcendentals=Mp * H,
        bytes_accessed=int(2 * Mp * H * in_bs + H * H * w_bs
                           + Mp * H * x.dtype.itemsize),
    )

    out = pl.pallas_call(
        kernel,
        out_shape=jax.ShapeDtypeStruct((Mp, H), x.dtype),
        grid_spec=pltpu.PrefetchScalarGridSpec(
            num_scalar_prefetch=1,                                 # seed -> SMEM
            grid=(gm, gn, gk),
            in_specs=[
                pl.BlockSpec((tm, tk), lambda i, j, k, s: (i, k)),  # x (matmul LHS)
                pl.BlockSpec((tk, tn), lambda i, j, k, s: (k, j)),  # Wt block
                pl.BlockSpec((1, tn), lambda i, j, k, s: (0, j)),   # bias row
                pl.BlockSpec((tm, tn), lambda i, j, k, s: (i, j)),  # x (epilogue)
            ],
            out_specs=pl.BlockSpec((tm, tn), lambda i, j, k, s: (i, j)),
            scratch_shapes=[pltpu.VMEM((tm, tn), jnp.float32)],     # f32 accumulator
        ),
        compiler_params=pltpu.CompilerParams(
            dimension_semantics=("parallel", "parallel", "arbitrary"),
            vmem_limit_bytes=vmem_limit,
        ),
        cost_estimate=cost,
    )(seed_arr, x2d, wt, b_row, x2d)

    return out[:M].reshape(orig_shape)


if __name__ == "__main__":
    # Small shapes consistent with the module: inner_size = 32, batch=2, seq=8.
    B, T, H = 2, 8, 32
    dropout_p = 0.1
    use_bias = True

    key = jax.random.PRNGKey(0)
    kx, kw, kb = jax.random.split(key, 3)

    x = jax.random.normal(kx, (B, T, H), dtype=jnp.float32)

    # Deterministic PyTorch-like Linear init: U(-1/sqrt(H), 1/sqrt(H)).
    bound = 1.0 / (H ** 0.5)
    weight = jax.random.uniform(kw, (H, H), jnp.float32, -bound, bound)  # (out, in)
    bias = (jax.random.uniform(kb, (H,), jnp.float32, -bound, bound)
            if use_bias else None)

    # Eval-mode forward (dropout is identity) vs pure-JAX reference.
    out = regulated_layer(x, weight, bias, p=dropout_p, training=False, seed=0)
    out = jax.block_until_ready(out)
    ref = x * jax.nn.sigmoid(x @ weight.T + bias)
    assert jnp.allclose(out, ref, atol=1e-5, rtol=1e-5), "mismatch vs reference"

    # Training-mode smoke test: every element must be either exactly dropped (0)
    # or the reference scaled by 1/(1-p) (inverted dropout).
    out_tr = regulated_layer(x, weight, bias, p=dropout_p, training=True, seed=123)
    out_tr = jax.block_until_ready(out_tr)
    scaled = ref / (1.0 - dropout_p)
    ok = jnp.isclose(out_tr, 0.0, atol=1e-6) | jnp.isclose(out_tr, scaled,
                                                           atol=1e-5, rtol=1e-5)
    assert bool(jnp.all(ok)), "training-mode dropout mismatch"

    print("KERNEL_OK")
</pallas_src>

<mosaic_0001>
module attributes {stable_mosaic.version = 11 : i64} {
  func.func @_regulated_kernel(%arg0: i32, %arg1: i32, %arg2: i32, %arg3: memref<1xi32, #tpu.memory_space<smem>>, %arg4: memref<16x32xf32, #tpu.memory_space<vmem>>, %arg5: memref<32x32xf32, #tpu.memory_space<vmem>>, %arg6: memref<1x32xf32, #tpu.memory_space<vmem>>, %arg7: memref<16x32xf32, #tpu.memory_space<vmem>>, %arg8: memref<16x32xf32, #tpu.memory_space<vmem>>, %arg9: memref<16x32xf32, #tpu.memory_space<vmem>>) attributes {dimension_semantics = [#tpu.dimension_semantics<parallel>, #tpu.dimension_semantics<parallel>, #tpu.dimension_semantics<arbitrary>], iteration_bounds = array<i64: 1, 1, 1>, scalar_prefetch = 1 : i64, scratch_operands = 1 : i64, tpu.core_type = #tpu.core_type<tc>, window_params = [{transform_indices = @transform_0, window_bounds = array<i64: 16, 32>}, {transform_indices = @transform_1, window_bounds = array<i64: 32, 32>}, {transform_indices = @transform_2, window_bounds = array<i64: 1, 32>}, {transform_indices = @transform_3, window_bounds = array<i64: 16, 32>}, {transform_indices = @transform_4, window_bounds = array<i64: 16, 32>}]} {
    %c0_i32 = arith.constant 0 : i32
    %0 = arith.cmpi eq, %arg2, %c0_i32 : i32
    %1 = arith.extui %0 : i1 to i32
    %c0_i32_0 = arith.constant 0 : i32
    %2 = arith.cmpi ne, %1, %c0_i32_0 : i32
    scf.if %2 {
      %cst_10 = arith.constant 0.000000e+00 : f32
      %12 = vector.broadcast %cst_10 : f32 to vector<16x32xf32>
      %c0_11 = arith.constant 0 : index
      %c0_12 = arith.constant 0 : index
      %13 = vector.load %arg9[%c0_11, %c0_12] : memref<16x32xf32, #tpu.memory_space<vmem>>, vector<16x32xf32>
      tpu.vector_store %arg9[%c0_11, %c0_12], %12 {strides = array<i32>} : memref<16x32xf32, #tpu.memory_space<vmem>>, vector<16x32xf32>,
    } else {
    }
    %c0 = arith.constant 0 : index
    %c0_1 = arith.constant 0 : index
    %3 = vector.load %arg9[%c0, %c0_1] : memref<16x32xf32, #tpu.memory_space<vmem>>, vector<16x32xf32>
    %c0_2 = arith.constant 0 : index
    %c0_3 = arith.constant 0 : index
    %4 = vector.load %arg4[%c0_2, %c0_3] : memref<16x32xf32, #tpu.memory_space<vmem>>, vector<16x32xf32>
    %c0_4 = arith.constant 0 : index
    %c0_5 = arith.constant 0 : index
    %5 = vector.load %arg5[%c0_4, %c0_5] : memref<32x32xf32, #tpu.memory_space<vmem>>, vector<32x32xf32>
    %cst = arith.constant dense<0.000000e+00> : vector<16x32xf32>
    %6 = tpu.matmul %4, %5, %cst {dimension_numbers = #tpu.dot_dimension_numbers<[1], [0], [0], [1], [0, 0, 1, 1], [], []>} : vector<16x32xf32>, vector<32x32xf32>, vector<16x32xf32> -> vector<16x32xf32>
    %7 = arith.addf %3, %6 : vector<16x32xf32>
    %c0_6 = arith.constant 0 : index
    %c0_7 = arith.constant 0 : index
    %8 = vector.load %arg9[%c0_6, %c0_7] : memref<16x32xf32, #tpu.memory_space<vmem>>, vector<16x32xf32>
    tpu.vector_store %arg9[%c0_6, %c0_7], %7 {strides = array<i32>} : memref<16x32xf32, #tpu.memory_space<vmem>>, vector<16x32xf32>,
    %c0_i32_8 = arith.constant 0 : i32
    %9 = arith.cmpi eq, %arg2, %c0_i32_8 : i32
    %10 = arith.extui %9 : i1 to i32
    %c0_i32_9 = arith.constant 0 : i32
    %11 = arith.cmpi ne, %10, %c0_i32_9 : i32
    scf.if %11 {
      %c0_10 = arith.constant 0 : index
      %c0_11 = arith.constant 0 : index
      %12 = vector.load %arg9[%c0_10, %c0_11] : memref<16x32xf32, #tpu.memory_space<vmem>>, vector<16x32xf32>
      %c0_12 = arith.constant 0 : index
      %c0_13 = arith.constant 0 : index
      %13 = vector.load %arg6[%c0_12, %c0_13] : memref<1x32xf32, #tpu.memory_space<vmem>>, vector<1x32xf32>
      %14 = vector.broadcast %13 : vector<1x32xf32> to vector<16x32xf32>
      %15 = arith.addf %12, %14 : vector<16x32xf32>
      %16 = arith.negf %15 : vector<16x32xf32>
      %17 = math.exp %16 : vector<16x32xf32>
      %cst_14 = arith.constant 1.000000e+00 : f32
      %18 = vector.broadcast %cst_14 : f32 to vector<16x32xf32>
      %19 = arith.addf %18, %17 : vector<16x32xf32>
      %20 = arith.divf %18, %19 : vector<16x32xf32>
      %c0_15 = arith.constant 0 : index
      %c0_16 = arith.constant 0 : index
      %21 = vector.load %arg7[%c0_15, %c0_16] : memref<16x32xf32, #tpu.memory_space<vmem>>, vector<16x32xf32>
      %22 = arith.mulf %21, %20 : vector<16x32xf32>
      %c0_17 = arith.constant 0 : index
      %c0_18 = arith.constant 0 : index
      %23 = vector.load %arg8[%c0_17, %c0_18] : memref<16x32xf32, #tpu.memory_space<vmem>>, vector<16x32xf32>
      tpu.vector_store %arg8[%c0_17, %c0_18], %22 {strides = array<i32>} : memref<16x32xf32, #tpu.memory_space<vmem>>, vector<16x32xf32>,
    } else {
    }
    return
  }
  func.func @transform_0(%arg0: i32, %arg1: i32, %arg2: i32, %arg3: memref<1xi32, #tpu.memory_space<smem>>) -> (i32, i32) {
    %c0_i32 = arith.constant 0 : i32
    return %arg0, %arg2 : i32, i32
  }
  func.func @transform_1(%arg0: i32, %arg1: i32, %arg2: i32, %arg3: memref<1xi32, #tpu.memory_space<smem>>) -> (i32, i32) {
    %c0_i32 = arith.constant 0 : i32
    return %arg2, %arg1 : i32, i32
  }
  func.func @transform_2(%arg0: i32, %arg1: i32, %arg2: i32, %arg3: memref<1xi32, #tpu.memory_space<smem>>) -> (i32, i32) {
    %c0_i32 = arith.constant 0 : i32
    %c0_i32_0 = arith.constant 0 : i32
    return %c0_i32, %arg1 : i32, i32
  }
  func.func @transform_3(%arg0: i32, %arg1: i32, %arg2: i32, %arg3: memref<1xi32, #tpu.memory_space<smem>>) -> (i32, i32) {
    %c0_i32 = arith.constant 0 : i32
    return %arg0, %arg1 : i32, i32
  }
  func.func @transform_4(%arg0: i32, %arg1: i32, %arg2: i32, %arg3: memref<1xi32, #tpu.memory_space<smem>>) -> (i32, i32) {
    %c0_i32 = arith.constant 0 : i32
    return %arg0, %arg1 : i32, i32
  }
}

</mosaic_0001>

<llo_original>
// kernel: tpu_custom_call.1
$region0: #{tpu_custom_call.1}
  #allocation0 [shape = 'u32[]', space=smem, size = 0x4, offset = 0x4, fixed_abs, tag = 'smem constant byte address 0x4 - core index']
  #allocation1 [shape = 'u32[144,128]{1,0:T(1,128)}', space=vmem, size = 0x12000, scoped, tag = 'internal scratch']
  #allocation2 [shape = 'f32[16,32]{1,0:T(8,128)}', space=vmem, size = 0x2000, scoped, tag = 'scratch operand']
  #allocation3 [shape = 's32[1]{0}', space=sflag, size = 0x4, scoped, tag = 'scoped memory for tpu_custom_call.1']
  #allocation4 [shape = 's32[1]{0:T(128)S(6)}', space=smem, size = 0x200, scoped, tag = 'prefetched SMEM operand 0']
  %s0 = inlined_call_operand.<no memory space> [shape: s32[1], index: 0, kind: input, shape index: {}]
  %s1 = inlined_call_operand.hbm [shape: f32[16,32], index: 1, kind: input, shape index: {}]
  %s2 = inlined_call_operand.hbm [shape: f32[32,32], index: 2, kind: input, shape index: {}]
  %s3 = inlined_call_operand.vmem [shape: f32[1,32], index: 3, kind: input, shape index: {}]
  %s4 = inlined_call_operand.hbm [shape: f32[16,32], index: 4, kind: input, shape index: {}]
  %s5 = inlined_call_operand.hbm [shape: f32[16,32], index: 5, kind: output, shape index: {}]
  %s6 = sld [smem:[#allocation0]]
  $region46: #{tpu_custom_call.1} parent=0
    _
  %s8 = ssub.s32 1, %s6
  %s9 = scalar_select 0, %s8, %s6
  %10 = sst [smem:[#allocation4]] %s0
  $region1: #{tpu_custom_call.1} parent=0
    #allocation5 [shape = 'u8[8192]{0}', space=vmem, size = 0x2000, scoped, tag = 'input window, operand 1, single buffered']
    #allocation6 [shape = 's32[1]{0}', space=sflag, size = 0x4, scoped, tag = 'scoped memory for tpu_custom_call.1']
    #allocation7 [shape = 's32[1]{0}', space=sflag, size = 0x4, scoped, tag = 'scoped memory for tpu_custom_call.1']
    #allocation8 [shape = 'u8[16384]{0}', space=vmem, size = 0x4000, scoped, tag = 'input window, operand 2, single buffered']
    #allocation9 [shape = 's32[1]{0}', space=sflag, size = 0x4, scoped, tag = 'scoped memory for tpu_custom_call.1']
    #allocation10 [shape = 'u8[8192]{0}', space=vmem, size = 0x2000, scoped, tag = 'input window, operand 4, single buffered']
    #allocation11 [shape = 'u8[8192]{0}', space=vmem, size = 0x2000, scoped, tag = 'output window, operand 0, single buffered']
    %11 = vsyncpa [#allocation6], 0
    %12 = vsyncpa [#allocation9], 0
    %13 = vsyncpa [#allocation7], 0
    // Predicated region
    $region2: #{tpu_custom_call.1} parent=1 // pred_check
      _
    $region3: #{tpu_custom_call.1} parent=1 // pred_check_branch
      %15 = sbr.rel (0) target = $region5
    $region4: #{tpu_custom_call.1} parent=1 // pred_region
      %s17 = ssub.s32 256, 256
      %18 = vsyncadd [#allocation6], %s17
      %s19 = sshll.u32 [#allocation5], 4
      %s20 = int_to_ptr.vmem [resolvable:$true] %s19
      %25 = dma.hbm_to_vmem [thread:$0]  %s1, 256, %s20, [#allocation6], 128, 128, 8
    $region5: #{tpu_custom_call.1} parent=1 // pred_fallthru
      _
    // Predicated region
    $region6: #{tpu_custom_call.1} parent=1 // pred_check
      _
    $region7: #{tpu_custom_call.1} parent=1 // pred_check_branch
      %27 = sbr.rel (0) target = $region9
    $region8: #{tpu_custom_call.1} parent=1 // pred_region
      %s29 = ssub.s32 512, 512
      %30 = vsyncadd [#allocation9], %s29
      %s31 = sshll.u32 [#allocation8], 4
      %s32 = int_to_ptr.vmem [resolvable:$true] %s31
      %37 = dma.hbm_to_vmem [thread:$0]  %s2, 512, %s32, [#allocation9], 128, 128, 8
    $region9: #{tpu_custom_call.1} parent=1 // pred_fallthru
      _
    // Predicated region
    $region10: #{tpu_custom_call.1} parent=1 // pred_check
      _
    $region11: #{tpu_custom_call.1} parent=1 // pred_check_branch
      %39 = sbr.rel (0) target = $region13
    $region12: #{tpu_custom_call.1} parent=1 // pred_region
      _
    $region13: #{tpu_custom_call.1} parent=1 // pred_fallthru
      _
    // Predicated region
    $region14: #{tpu_custom_call.1} parent=1 // pred_check
      _
    $region15: #{tpu_custom_call.1} parent=1 // pred_check_branch
      %41 = sbr.rel (0) target = $region17
    $region16: #{tpu_custom_call.1} parent=1 // pred_region
      %s43 = ssub.s32 256, 256
      %44 = vsyncadd [#allocation9], %s43
      %s45 = sshll.u32 [#allocation10], 4
      %s46 = int_to_ptr.vmem [resolvable:$true] %s45
      %51 = dma.hbm_to_vmem [thread:$0]  %s4, 256, %s46, [#allocation9], 128, 128, 8
    $region17: #{tpu_custom_call.1} parent=1 // pred_fallthru
      _
    // Predicated region
    $region18: #{tpu_custom_call.1} parent=1 // pred_check
      _
    $region19: #{tpu_custom_call.1} parent=1 // pred_check_branch
      %53 = sbr.rel (0) target = $region21
    $region20: #{tpu_custom_call.1} parent=1 // pred_region
      %54 = dma.done [#allocation6], 256
    $region21: #{tpu_custom_call.1} parent=1 // pred_fallthru
      _
    // Predicated region
    $region22: #{tpu_custom_call.1} parent=1 // pred_check
      _
    $region23: #{tpu_custom_call.1} parent=1 // pred_check_branch
      %56 = sbr.rel (0) target = $region25
    $region24: #{tpu_custom_call.1} parent=1 // pred_region
      %57 = dma.done [#allocation9], 512
    $region25: #{tpu_custom_call.1} parent=1 // pred_fallthru
      _
    // Predicated region
    $region26: #{tpu_custom_call.1} parent=1 // pred_check
      _
    $region27: #{tpu_custom_call.1} parent=1 // pred_check_branch
      %59 = sbr.rel (0) target = $region29
    $region28: #{tpu_custom_call.1} parent=1 // pred_region
      %60 = dma.done [#allocation9], 256
    $region29: #{tpu_custom_call.1} parent=1 // pred_fallthru
      _
    %p61 = scmp.eq.s32.totalorder 0, 0
    // Predicated region
    $region30: #{tpu_custom_call.1} parent=1 // pred_check
      %p62 = pneg %p61
    $region31: #{tpu_custom_call.1} parent=1 // pred_check_branch
      %64 = sbr.rel (%p62) target = $region33
    $region32: #{tpu_custom_call.1} parent=1 // pred_region
      %vm65 = vcmask 261120
      %66 = vst.msk [vmem:[#allocation2] sm:$0xff] %vm65, 0.0
      %67 = vst.msk [vmem:[#allocation2 + $0x8] sm:$0xff] %vm65, 0.0
    $region33: #{tpu_custom_call.1} parent=1 // pred_fallthru
      _
    %v68 = vld [vmem:[#allocation2] sm:$0xff]
    %v69 = vld [vmem:[#allocation2 + $0x8] sm:$0xff]
    %v70 = vld [vmem:[#allocation5] sm:$0xff]
    %v71 = vld [vmem:[#allocation5 + $0x8] sm:$0xff]
    %v72 = vld [vmem:[#allocation8] sm:$0xff]
    %v73 = vld [vmem:[#allocation8 + $0x8] sm:$0xff]
    %v74 = vld [vmem:[#allocation8 + $0x10] sm:$0xff]
    %v75 = vld [vmem:[#allocation8 + $0x18] sm:$0xff]
    %vm76 = vcmask 261120
    %v78 = vsel %vm76, %v70, 0
    %v81 = vsel %vm76, %v71, 0
    %83 = vmatprep.subr.mxu0 0.0
    %84 = vmatpush1.msra.mxu0 %v72
    %85 = vmatprep.subr.mxu0 0.0
    %86 = vmatpush1.msra.mxu0 %v73
    %87 = vmatprep.subr.mxu0 0.0
    %88 = vmatpush1.msra.mxu0 %v74
    %89 = vmatprep.subr.mxu0 0.0
    %90 = vmatpush1.msra.mxu0 %v75
    %91 = vmatprep.subr.mxu0 0.0
    %92 = vmatpush1.msra.mxu0 0.0
    %93 = vmatprep.subr.mxu0 0.0
    %94 = vmatpush1.msra.mxu0 0.0
    %95 = vmatprep.subr.mxu0 0.0
    %96 = vmatpush1.msra.mxu0 0.0
    %97 = vmatprep.subr.mxu0 0.0
    %98 = vmatpush1.msra.mxu0 0.0
    %99 = vmatprep.subr.mxu0 0.0
    %100 = vmatpush1.msra.mxu0 0.0
    %101 = vmatprep.subr.mxu0 0.0
    %102 = vmatpush1.msra.mxu0 0.0
    %103 = vmatprep.subr.mxu0 0.0
    %104 = vmatpush1.msra.mxu0 0.0
    %105 = vmatprep.subr.mxu0 0.0
    %106 = vmatpush1.msra.mxu0 0.0
    %107 = vmatprep.subr.mxu0 0.0
    %108 = vmatpush1.msra.mxu0 0.0
    %109 = vmatprep.subr.mxu0 0.0
    %110 = vmatpush1.msra.mxu0 0.0
    %111 = vmatprep.subr.mxu0 0.0
    %112 = vmatpush1.msra.mxu0 0.0
    %113 = vmatprep.subr.mxu0 0.0
    %114 = vmatpush1.msra.mxu0 0.0
    %115 = vmatprep.subr.mxu0 0.0
    %116 = vmatpush1.msra.mxu0 0.0
    %117 = vmatprep.subr.mxu0 0.0
    %118 = vmatpush1.msra.mxu0 0.0
    %119 = vmatprep.subr.mxu0 0.0
    %120 = vmatpush1.msra.mxu0 0.0
    %121 = vmatprep.subr.mxu0 0.0
    %122 = vmatpush1.msra.mxu0 0.0
    %123 = vmatprep.subr.mxu0 0.0
    %124 = vmatpush1.msra.mxu0 0.0
    %125 = vmatprep.subr.mxu0 0.0
    %126 = vmatpush1.msra.mxu0 0.0
    %127 = vmatprep.subr.mxu0 0.0
    %128 = vmatpush1.msra.mxu0 0.0
    %129 = vmatprep.subr.mxu0 0.0
    %130 = vmatpush1.msra.mxu0 0.0
    %131 = vmatprep.subr.mxu0 0.0
    %132 = vmatpush1.msra.mxu0 0.0
    %133 = vmatprep.subr.mxu0 0.0
    %134 = vmatpush1.msra.mxu0 0.0
    %135 = vmatprep.subr.mxu0 0.0
    %136 = vmatpush1.msra.mxu0 0.0
    %137 = vmatprep.subr.mxu0 0.0
    %138 = vmatpush1.msra.mxu0 0.0
    %139 = vmatprep.subr.mxu0 0.0
    %140 = vmatpush1.msra.mxu0 0.0
    %141 = vmatprep.subr.mxu0 0.0
    %142 = vmatpush1.msra.mxu0 0.0
    %143 = vmatprep.subr.mxu0 0.0
    %144 = vmatpush1.msra.mxu0 0.0
    %145 = vmatprep.subr.mxu0 0.0
    %146 = vmatpush1.msra.mxu0 0.0
    %147 = vmatprep.mubr.f32.mxu0 0.0
    %148 = vmatmul.mubr.f32.gmra.mrb[0].mxu0 %v78
    %v149 = vpop.f32.mrb[0].mxu0
    %v150 = vadd.f32 0.0, %v149
    %v151 = vpop.f32.mrb[0].mxu0
    %152 = vmatprep.mubr.f32.mxu0 0.0
    %153 = vmatmul.mubr.f32.gmra.mrb[0].mxu0 %v81
    %v154 = vpop.f32.mrb[0].mxu0
    %v155 = vadd.f32 0.0, %v154
    %v156 = vpop.f32.mrb[0].mxu0
    %157 = vdwg.mxu0
    %v158 = vadd.f32 %v68, %v150
    %v159 = vadd.f32 %v69, %v155
    %160 = vst.msk [vmem:[#allocation2] sm:$0xff] %vm76, %v158
    %161 = vst.msk [vmem:[#allocation2 + $0x8] sm:$0xff] %vm76, %v159
    // Predicated region
    $region34: #{tpu_custom_call.1} parent=1 // pred_check
      %p162 = pneg %p61
    $region35: #{tpu_custom_call.1} parent=1 // pred_check_branch
      %164 = sbr.rel (%p162) target = $region37
    $region36: #{tpu_custom_call.1} parent=1 // pred_region
      %v165 = vld [vmem:[#allocation2] sm:$0xff]
      %v166 = vld [vmem:[#allocation2 + $0x8] sm:$0xff]
      %v167 = vld [vmem:[%s3] sm:$0x1]
      %v169 = vlaneseq
      %v170 = vshrl.u32 %v169, 7
      %v171 = vsub.s32 0, %v170
      %v172 = vrot.slane %v167, %v171
      %v174 = vadd.f32 %v165, %v172
      %v175 = vadd.f32 %v166, %v172
      %v176 = vxor.u32 %v174, 2147483648
      %v177 = vxor.u32 %v175, 2147483648
      %v178 = vmul.f32 %v176, 1.442695
      %v179 = vpow.pop %v178
      %v180 = vmul.f32 %v177, 1.442695
      %v181 = vpow.pop %v180
      %v182 = vadd.f32 %v179, 1.0
      %v183 = vadd.f32 %v181, 1.0
      %v184 = vrcp.pop %v182
      %v185 = vmul.f32 1.0, %v184
      %v186 = vrcp.pop %v183
      %v187 = vmul.f32 1.0, %v186
      %v188 = vld [vmem:[#allocation10] sm:$0xff]
      %v189 = vld [vmem:[#allocation10 + $0x8] sm:$0xff]
      %v190 = vmul.f32 %v188, %v185
      %v191 = vmul.f32 %v189, %v187
      %192 = vst.msk [vmem:[#allocation11] sm:$0xff] %vm76, %v190
      %193 = vst.msk [vmem:[#allocation11 + $0x8] sm:$0xff] %vm76, %v191
    $region37: #{tpu_custom_call.1} parent=1 // pred_fallthru
      _
    // Predicated region
    $region38: #{tpu_custom_call.1} parent=1 // pred_check
      _
    $region39: #{tpu_custom_call.1} parent=1 // pred_check_branch
      %195 = sbr.rel (0) target = $region41
    $region40: #{tpu_custom_call.1} parent=1 // pred_region
      %s197 = ssub.s32 256, 256
      %198 = vsyncadd [#allocation7], %s197
      %s199 = sshll.u32 [#allocation11], 4
      %s200 = int_to_ptr.vmem [resolvable:$true] %s199
      %205 = dma.vmem_to_hbm [thread:$0]  %s200, 256, %s5, [#allocation7], 128, 128, 8
    $region41: #{tpu_custom_call.1} parent=1 // pred_fallthru
      _
    // Predicated region
    $region42: #{tpu_custom_call.1} parent=1 // pred_check
      _
    $region43: #{tpu_custom_call.1} parent=1 // pred_check_branch
      %207 = sbr.rel (0) target = $region45
    $region44: #{tpu_custom_call.1} parent=1 // pred_region
      %208 = dma.done [#allocation7], 256
    $region45: #{tpu_custom_call.1} parent=1 // pred_fallthru
      _
    %209 = vsyncpa [#allocation6], 1
    %210 = vsyncpa [#allocation9], 1
    %211 = vsyncpa [#allocation7], 1

</llo_original>
